<compile_context>
chip_gen: v7x
topology: tpu7x:2x2x1
jax: 0.10.0
libtpu: 0.0.40
codegen_flags: <defaults>
</compile_context>

<pallas_src>
import jax
import jax.numpy as jnp
from jax.experimental import pallas as pl
from jax.experimental.pallas import tpu as pltpu


def _bpr_pos_kernel(u_ref, i_ref, pos_ref):
    # u_ref / i_ref: (K, TB) slabs. VPU multiply + XLU sublane reduction
    # yields a lane-dense (1, TB) row of scores.
    pos_ref[...] = jnp.sum(u_ref[...] * i_ref[...], axis=0, keepdims=True)


def _bpr_posneg_kernel(u_ref, i_ref, n_ref, pos_ref, neg_ref):
    u = u_ref[...]
    pos_ref[...] = jnp.sum(u * i_ref[...], axis=0, keepdims=True)
    neg_ref[...] = jnp.sum(u * n_ref[...], axis=0, keepdims=True)


def bpr_forward(P, Q, users, items, neg_items=None, *, tile=2048):
    """Pallas implementation of BPR_MatrixFactorization.forward."""
    B = users.shape[0]
    K = P.shape[1]
    users = users.astype(jnp.int32)
    items = items.astype(jnp.int32)

    # Batch tile on the lane axis: a multiple of 128, no larger than needed.
    tb = min(tile, pl.cdiv(B, 128) * 128)
    b_pad = pl.cdiv(B, tb) * tb
    num_tiles = b_pad // tb

    def gather_kt(table, idx):
        # Row gather -> transpose so K sits on sublanes and batch on lanes,
        # padded up to a whole number of TB-wide tiles.
        e = jnp.take(table, idx, axis=0).astype(jnp.float32).T  # (K, B)
        if b_pad != B:
            e = jnp.pad(e, ((0, 0), (0, b_pad - B)))
        return e

    u_e = gather_kt(P, users)
    i_e = gather_kt(Q, items)

    in_spec = pl.BlockSpec((K, tb), lambda i: (0, i))
    out_spec = pl.BlockSpec((1, tb), lambda i: (0, i))
    out_row = jax.ShapeDtypeStruct((1, b_pad), jnp.float32)
    cparams = pltpu.CompilerParams(dimension_semantics=("parallel",))

    if neg_items is None:
        pos = pl.pallas_call(
            _bpr_pos_kernel,
            out_shape=out_row,
            grid=(num_tiles,),
            in_specs=[in_spec, in_spec],
            out_specs=out_spec,
            compiler_params=cparams,
        )(u_e, i_e)
        return pos[0, :B]

    n_e = gather_kt(Q, neg_items.astype(jnp.int32))
    pos, neg = pl.pallas_call(
        _bpr_posneg_kernel,
        out_shape=(out_row, out_row),
        grid=(num_tiles,),
        in_specs=[in_spec, in_spec, in_spec],
        out_specs=[out_spec, out_spec],
        compiler_params=cparams,
    )(u_e, i_e, n_e)
    return pos[0, :B], neg[0, :B]


if __name__ == "__main__":
    # Deterministic parameter init, mirroring nn.init.normal_(std=0.01).
    M, N, K, B = 32, 48, 20, 8
    key = jax.random.PRNGKey(0)
    kP, kQ, ku, ki, kn = jax.random.split(key, 5)
    P = (0.01 * jax.random.normal(kP, (M, K))).astype(jnp.float32)
    Q = (0.01 * jax.random.normal(kQ, (N, K))).astype(jnp.float32)

    users = jax.random.randint(ku, (B,), 0, M, dtype=jnp.int32)
    items = jax.random.randint(ki, (B,), 0, N, dtype=jnp.int32)
    neg_items = jax.random.randint(kn, (B,), 0, N, dtype=jnp.int32)

    pos_pred, neg_pred = bpr_forward(P, Q, users, items, neg_items)
    pos_only = bpr_forward(P, Q, users, items)
    jax.block_until_ready((pos_pred, neg_pred, pos_only))

    # Pure-JAX reference (same semantics as the PyTorch forward).
    users_e = P[users]
    items_e = Q[items]
    neg_e = Q[neg_items]
    ref_pos = jnp.sum(users_e * items_e, axis=-1)
    ref_neg = jnp.sum(users_e * neg_e, axis=-1)

    assert pos_pred.shape == (B,) and neg_pred.shape == (B,)
    assert jnp.allclose(pos_pred, ref_pos, atol=1e-6)
    assert jnp.allclose(neg_pred, ref_neg, atol=1e-6)
    assert jnp.allclose(pos_only, ref_pos, atol=1e-6)

    print("KERNEL_OK")
</pallas_src>

<mosaic_0001>
module attributes {stable_mosaic.version = 11 : i64} {
  func.func @_bpr_posneg_kernel(%arg0: i32, %arg1: memref<20x128xf32, #tpu.memory_space<vmem>>, %arg2: memref<20x128xf32, #tpu.memory_space<vmem>>, %arg3: memref<20x128xf32, #tpu.memory_space<vmem>>, %arg4: memref<1x128xf32, #tpu.memory_space<vmem>>, %arg5: memref<1x128xf32, #tpu.memory_space<vmem>>) attributes {dimension_semantics = [#tpu.dimension_semantics<parallel>], iteration_bounds = array<i64: 1>, scalar_prefetch = 0 : i64, scratch_operands = 0 : i64, tpu.core_type = #tpu.core_type<tc>, window_params = [{transform_indices = @transform_0, window_bounds = array<i64: 20, 128>}, {transform_indices = @transform_1, window_bounds = array<i64: 20, 128>}, {transform_indices = @transform_2, window_bounds = array<i64: 20, 128>}, {transform_indices = @transform_3, window_bounds = array<i64: 1, 128>}, {transform_indices = @transform_4, window_bounds = array<i64: 1, 128>}]} {
    %c0 = arith.constant 0 : index
    %c0_0 = arith.constant 0 : index
    %0 = vector.load %arg1[%c0, %c0_0] : memref<20x128xf32, #tpu.memory_space<vmem>>, vector<20x128xf32>
    %c0_1 = arith.constant 0 : index
    %c0_2 = arith.constant 0 : index
    %1 = vector.load %arg2[%c0_1, %c0_2] : memref<20x128xf32, #tpu.memory_space<vmem>>, vector<20x128xf32>
    %2 = arith.mulf %0, %1 : vector<20x128xf32>
    %cst = arith.constant dense<0.000000e+00> : vector<128xf32>
    %3 = vector.multi_reduction <add>, %2, %cst [0] : vector<20x128xf32> to vector<128xf32>
    %4 = vector.shape_cast %3 : vector<128xf32> to vector<1x128xf32>
    %c0_3 = arith.constant 0 : index
    %c0_4 = arith.constant 0 : index
    %5 = vector.load %arg4[%c0_3, %c0_4] : memref<1x128xf32, #tpu.memory_space<vmem>>, vector<1x128xf32>
    tpu.vector_store %arg4[%c0_3, %c0_4], %4 {strides = array<i32>} : memref<1x128xf32, #tpu.memory_space<vmem>>, vector<1x128xf32>,
    %c0_5 = arith.constant 0 : index
    %c0_6 = arith.constant 0 : index
    %6 = vector.load %arg3[%c0_5, %c0_6] : memref<20x128xf32, #tpu.memory_space<vmem>>, vector<20x128xf32>
    %7 = arith.mulf %0, %6 : vector<20x128xf32>
    %cst_7 = arith.constant dense<0.000000e+00> : vector<128xf32>
    %8 = vector.multi_reduction <add>, %7, %cst_7 [0] : vector<20x128xf32> to vector<128xf32>
    %9 = vector.shape_cast %8 : vector<128xf32> to vector<1x128xf32>
    %c0_8 = arith.constant 0 : index
    %c0_9 = arith.constant 0 : index
    %10 = vector.load %arg5[%c0_8, %c0_9] : memref<1x128xf32, #tpu.memory_space<vmem>>, vector<1x128xf32>
    tpu.vector_store %arg5[%c0_8, %c0_9], %9 {strides = array<i32>} : memref<1x128xf32, #tpu.memory_space<vmem>>, vector<1x128xf32>,
    return
  }
  func.func @transform_0(%arg0: i32) -> (i32, i32) {
    %c0_i32 = arith.constant 0 : i32
    %c0_i32_0 = arith.constant 0 : i32
    return %c0_i32, %arg0 : i32, i32
  }
  func.func @transform_1(%arg0: i32) -> (i32, i32) {
    %c0_i32 = arith.constant 0 : i32
    %c0_i32_0 = arith.constant 0 : i32
    return %c0_i32, %arg0 : i32, i32
  }
  func.func @transform_2(%arg0: i32) -> (i32, i32) {
    %c0_i32 = arith.constant 0 : i32
    %c0_i32_0 = arith.constant 0 : i32
    return %c0_i32, %arg0 : i32, i32
  }
  func.func @transform_3(%arg0: i32) -> (i32, i32) {
    %c0_i32 = arith.constant 0 : i32
    %c0_i32_0 = arith.constant 0 : i32
    return %c0_i32, %arg0 : i32, i32
  }
  func.func @transform_4(%arg0: i32) -> (i32, i32) {
    %c0_i32 = arith.constant 0 : i32
    %c0_i32_0 = arith.constant 0 : i32
    return %c0_i32, %arg0 : i32, i32
  }
}

</mosaic_0001>

<llo_original>
// kernel: tpu_custom_call.1
$region0: #{tpu_custom_call.1}
  #allocation0 [shape = 'u32[]', space=smem, size = 0x4, offset = 0x4, fixed_abs, tag = 'smem constant byte address 0x4 - core index']
  #allocation1 [shape = 'u32[144,128]{1,0:T(1,128)}', space=vmem, size = 0x12000, scoped, tag = 'internal scratch']
  %s0 = inlined_call_operand.hbm [shape: f32[20,128], index: 0, kind: input, shape index: {}]
  %s1 = inlined_call_operand.hbm [shape: f32[20,128], index: 1, kind: input, shape index: {}]
  %s2 = inlined_call_operand.hbm [shape: f32[20,128], index: 2, kind: input, shape index: {}]
  %s3 = inlined_call_operand.hbm [shape: f32[1,128], index: 3, kind: output, shape index: {0}]
  %s4 = inlined_call_operand.hbm [shape: f32[1,128], index: 4, kind: output, shape index: {1}]
  %5 = xla_tuple %s3, %s4
  %s6 = sld [smem:[#allocation0]]
  $region42: #{tpu_custom_call.1} parent=0
    _
  %s8 = ssub.s32 1, %s6
  %s9 = scalar_select 0, %s8, %s6
  $region1: #{tpu_custom_call.1} parent=0
    #allocation2 [shape = 'u8[12288]{0}', space=vmem, size = 0x3000, scoped, tag = 'input window, operand 0, single buffered']
    #allocation3 [shape = 's32[1]{0}', space=sflag, size = 0x4, scoped, tag = 'scoped memory for tpu_custom_call.1']
    #allocation4 [shape = 's32[1]{0}', space=sflag, size = 0x4, scoped, tag = 'scoped memory for tpu_custom_call.1']
    #allocation5 [shape = 'u8[12288]{0}', space=vmem, size = 0x3000, scoped, tag = 'input window, operand 1, single buffered']
    #allocation6 [shape = 's32[1]{0}', space=sflag, size = 0x4, scoped, tag = 'scoped memory for tpu_custom_call.1']
    #allocation7 [shape = 'u8[12288]{0}', space=vmem, size = 0x3000, scoped, tag = 'input window, operand 2, single buffered']
    #allocation8 [shape = 'u8[512]{0}', space=vmem, size = 0x400, scoped, tag = 'output window, operand 0, single buffered']
    #allocation9 [shape = 'u8[512]{0}', space=vmem, size = 0x400, scoped, tag = 'output window, operand 1, single buffered']
    #allocation10 [shape = 's32[1]{0}', space=sflag, size = 0x4, scoped, tag = 'scoped memory for tpu_custom_call.1']
    %10 = vsyncpa [#allocation3], 0
    %11 = vsyncpa [#allocation6], 0
    %12 = vsyncpa [#allocation4], 0
    %13 = vsyncpa [#allocation10], 0
    // Predicated region
    $region2: #{tpu_custom_call.1} parent=1 // pred_check
      _
    $region3: #{tpu_custom_call.1} parent=1 // pred_check_branch
      %15 = sbr.rel (0) target = $region5
    $region4: #{tpu_custom_call.1} parent=1 // pred_region
      %s17 = ssub.s32 384, 384
      %18 = vsyncadd [#allocation3], %s17
      %s19 = sshll.u32 [#allocation2], 4
      %s20 = int_to_ptr.vmem [resolvable:$true] %s19
      %25 = dma.hbm_to_vmem [thread:$0]  %s0, 384, %s20, [#allocation3], 128, 128, 8
    $region5: #{tpu_custom_call.1} parent=1 // pred_fallthru
      _
    // Predicated region
    $region6: #{tpu_custom_call.1} parent=1 // pred_check
      _
    $region7: #{tpu_custom_call.1} parent=1 // pred_check_branch
      %27 = sbr.rel (0) target = $region9
    $region8: #{tpu_custom_call.1} parent=1 // pred_region
      %s29 = ssub.s32 384, 384
      %30 = vsyncadd [#allocation6], %s29
      %s31 = sshll.u32 [#allocation5], 4
      %s32 = int_to_ptr.vmem [resolvable:$true] %s31
      %37 = dma.hbm_to_vmem [thread:$0]  %s1, 384, %s32, [#allocation6], 128, 128, 8
    $region9: #{tpu_custom_call.1} parent=1 // pred_fallthru
      _
    // Predicated region
    $region10: #{tpu_custom_call.1} parent=1 // pred_check
      _
    $region11: #{tpu_custom_call.1} parent=1 // pred_check_branch
      %39 = sbr.rel (0) target = $region13
    $region12: #{tpu_custom_call.1} parent=1 // pred_region
      %s41 = ssub.s32 384, 384
      %42 = vsyncadd [#allocation6], %s41
      %s43 = sshll.u32 [#allocation7], 4
      %s44 = int_to_ptr.vmem [resolvable:$true] %s43
      %49 = dma.hbm_to_vmem [thread:$0]  %s2, 384, %s44, [#allocation6], 128, 128, 8
    $region13: #{tpu_custom_call.1} parent=1 // pred_fallthru
      _
    // Predicated region
    $region14: #{tpu_custom_call.1} parent=1 // pred_check
      _
    $region15: #{tpu_custom_call.1} parent=1 // pred_check_branch
      %51 = sbr.rel (0) target = $region17
    $region16: #{tpu_custom_call.1} parent=1 // pred_region
      %52 = dma.done [#allocation3], 384
    $region17: #{tpu_custom_call.1} parent=1 // pred_fallthru
      _
    // Predicated region
    $region18: #{tpu_custom_call.1} parent=1 // pred_check
      _
    $region19: #{tpu_custom_call.1} parent=1 // pred_check_branch
      %54 = sbr.rel (0) target = $region21
    $region20: #{tpu_custom_call.1} parent=1 // pred_region
      %55 = dma.done [#allocation6], 384
    $region21: #{tpu_custom_call.1} parent=1 // pred_fallthru
      _
    // Predicated region
    $region22: #{tpu_custom_call.1} parent=1 // pred_check
      _
    $region23: #{tpu_custom_call.1} parent=1 // pred_check_branch
      %57 = sbr.rel (0) target = $region25
    $region24: #{tpu_custom_call.1} parent=1 // pred_region
      %58 = dma.done [#allocation6], 384
    $region25: #{tpu_custom_call.1} parent=1 // pred_fallthru
      _
    %v59 = vld [vmem:[#allocation2] sm:$0xff]
    %v60 = vld [vmem:[#allocation2 + $0x8] sm:$0xff]
    %v61 = vld [vmem:[#allocation2 + $0x10] sm:$0xf]
    %v62 = vld [vmem:[#allocation5] sm:$0xff]
    %v63 = vld [vmem:[#allocation5 + $0x8] sm:$0xff]
    %v64 = vld [vmem:[#allocation5 + $0x10] sm:$0xf]
    %v65 = vmul.f32 %v59, %v62
    %v66 = vmul.f32 %v60, %v63
    %v67 = vmul.f32 %v61, %v64
    %v68 = vadd.f32 %v65, %v66
    %vm69 = vcmask 1043456
    %v70 = vsel %vm69, %v67, 0.0
    %v71 = vadd.f32 %v68, %v70
    %v72 = vrot.slane %v71, 4
    %v73 = vadd.f32 %v71, %v72
    %v74 = vrot.slane %v73, 2
    %v75 = vadd.f32 %v73, %v74
    %v76 = vrot.slane %v75, 1
    %v77 = vadd.f32 %v75, %v76
    %78 = vst [vmem:[#allocation8] sm:$0x1] %v77
    %v79 = vld [vmem:[#allocation7] sm:$0xff]
    %v80 = vld [vmem:[#allocation7 + $0x8] sm:$0xff]
    %v81 = vld [vmem:[#allocation7 + $0x10] sm:$0xf]
    %v82 = vmul.f32 %v59, %v79
    %v83 = vmul.f32 %v60, %v80
    %v84 = vmul.f32 %v61, %v81
    %v85 = vadd.f32 %v82, %v83
    %v86 = vsel %vm69, %v84, 0.0
    %v87 = vadd.f32 %v85, %v86
    %v88 = vrot.slane %v87, 4
    %v89 = vadd.f32 %v87, %v88
    %v90 = vrot.slane %v89, 2
    %v91 = vadd.f32 %v89, %v90
    %v92 = vrot.slane %v91, 1
    %v93 = vadd.f32 %v91, %v92
    %94 = vst [vmem:[#allocation9] sm:$0x1] %v93
    // Predicated region
    $region26: #{tpu_custom_call.1} parent=1 // pred_check
      _
    $region27: #{tpu_custom_call.1} parent=1 // pred_check_branch
      %96 = sbr.rel (0) target = $region29
    $region28: #{tpu_custom_call.1} parent=1 // pred_region
      %s98 = ssub.s32 16, 16
      %99 = vsyncadd [#allocation4], %s98
      %s101 = sshll.u32 [#allocation8], 4
      %s102 = int_to_ptr.vmem [resolvable:$true] %s101
      %104 = dma.vmem_to_hbm [thread:$0]  %s102, 16, %s3, [#allocation4]
    $region29: #{tpu_custom_call.1} parent=1 // pred_fallthru
      _
    // Predicated region
    $region30: #{tpu_custom_call.1} parent=1 // pred_check
      _
    $region31: #{tpu_custom_call.1} parent=1 // pred_check_branch
      %106 = sbr.rel (0) target = $region33
    $region32: #{tpu_custom_call.1} parent=1 // pred_region
      %s108 = ssub.s32 16, 16
      %109 = vsyncadd [#allocation10], %s108
      %s111 = sshll.u32 [#allocation9], 4
      %s112 = int_to_ptr.vmem [resolvable:$true] %s111
      %114 = dma.vmem_to_hbm [thread:$0]  %s112, 16, %s4, [#allocation10]
    $region33: #{tpu_custom_call.1} parent=1 // pred_fallthru
      _
    // Predicated region
    $region34: #{tpu_custom_call.1} parent=1 // pred_check
      _
    $region35: #{tpu_custom_call.1} parent=1 // pred_check_branch
      %116 = sbr.rel (0) target = $region37
    $region36: #{tpu_custom_call.1} parent=1 // pred_region
      %117 = dma.done [#allocation4], 16
    $region37: #{tpu_custom_call.1} parent=1 // pred_fallthru
      _
    // Predicated region
    $region38: #{tpu_custom_call.1} parent=1 // pred_check
      _
    $region39: #{tpu_custom_call.1} parent=1 // pred_check_branch
      %119 = sbr.rel (0) target = $region41
    $region40: #{tpu_custom_call.1} parent=1 // pred_region
      %120 = dma.done [#allocation10], 16
    $region41: #{tpu_custom_call.1} parent=1 // pred_fallthru
      _
    %121 = vsyncpa [#allocation3], 1
    %122 = vsyncpa [#allocation6], 1
    %123 = vsyncpa [#allocation4], 1
    %124 = vsyncpa [#allocation10], 1

</llo_original>
